<compile_context>
chip_gen: v5e
topology: v5e:2x2
jax: 0.10.0
libtpu: 0.0.40
codegen_flags: <defaults>
</compile_context>

<pallas_src>
import functools

import jax
import jax.numpy as jnp
from jax.experimental import pallas as pl
from jax.experimental.pallas import tpu as pltpu


def _criterion_kernel(logits_ref, labels_ref, out_ref, acc_ref, *,
                      hw, tile_p, needs_mask, ignore_index):
    core = pl.program_id(0)
    b = pl.program_id(1)
    t = pl.program_id(2)
    nb = pl.num_programs(1)
    nt = pl.num_programs(2)

    @pl.when((b == 0) & (t == 0))
    def _init():
        acc_ref[...] = jnp.zeros_like(acc_ref)

    logits = logits_ref[...].astype(jnp.float32)     # (C, TILE) classes-on-sublanes
    labels = labels_ref[...]                          # (1, TILE) int32
    num_classes = logits.shape[0]

    # Tail mask (only generated when the padded pixel count != real pixel count).
    if needs_mask:
        lane = jax.lax.broadcasted_iota(jnp.int32, (1, tile_p), 1)
        pix = (core * nt + t) * tile_p + lane         # global pixel index in this image
        valid = (pix < hw).astype(jnp.float32)        # (1, TILE)
    else:
        valid = None

    # --- softmax over the class (sublane) axis ---
    m = jnp.max(logits, axis=0, keepdims=True)        # (1, TILE)
    e = jnp.exp(logits - m)                           # (C, TILE)  EUP
    s = jnp.sum(e, axis=0, keepdims=True)             # (1, TILE)
    p = e * pl.reciprocal(s, approx=True)             # (C, TILE)  EUP reciprocal

    cls_ids = jax.lax.broadcasted_iota(jnp.int32, (num_classes, tile_p), 0)

    # --- dice targets: ignored pixels map to class 0 (targets * mask), as in PyTorch ---
    not_ign = labels != ignore_index                  # (1, TILE) bool
    tgt = jnp.where(not_ign, labels, 0)               # (1, TILE)
    onehot = (cls_ids == tgt).astype(jnp.float32)     # (C, TILE)
    if valid is not None:
        onehot = onehot * valid                       # zero artificially padded pixels
    p2 = p * p
    if valid is not None:
        p2 = p2 * valid

    # lane-dense accumulation; cross-lane reduce deferred to finalize
    acc_ref[0] += p * onehot                          # intersection contribution
    acc_ref[1] += p2                                  # X_sum contribution
    acc_ref[2] += onehot                              # Y_sum contribution (t == t^2)

    # --- cross entropy over real, non-ignored pixels ---
    # logit at the label via one-hot gather (ignore_index never matches a class id)
    lab_onehot = (cls_ids == labels).astype(jnp.float32)              # (C, TILE)
    gathered = jnp.sum(logits * lab_onehot, axis=0, keepdims=True)    # (1, TILE)
    ce_per_pix = (m - gathered) + jnp.log(s)                          # -log_softmax[label]
    ce_mask = not_ign.astype(jnp.float32)                             # (1, TILE)
    if valid is not None:
        ce_mask = ce_mask * valid
    acc_ref[3, 0:1, :] += ce_per_pix * ce_mask                        # CE numerator
    acc_ref[3, 1:2, :] += ce_mask                                     # CE pixel count

    @pl.when((b == nb - 1) & (t == nt - 1))
    def _finalize():
        out_ref[0] = jnp.sum(acc_ref[...], axis=-1)   # (4, C) per-core partial stats


def criterion_loss(outputs, labels, *, num_classes, ignore_index=255,
                   cross_entropy_weight=0.5, dice_loss_weight=0.5,
                   tile_p=1024, num_core_splits=2):
    """outputs: (B, C, H, W) float logits (any float dtype); labels: (B, H, W) ints."""
    B, C, H, W = outputs.shape
    assert C == num_classes and C >= 2
    hw = H * W

    # Free reshapes only: stay in native NCHW layout and native dtype.
    logits = outputs.reshape(B, C, hw)
    lab = labels.reshape(B, 1, hw).astype(jnp.int32)

    # Clamp tile to the (128-aligned) per-core pixel extent of one image.
    tile_p = max(128, min(tile_p, pl.cdiv(hw, 128 * num_core_splits) * 128))
    # VMEM budget: double-buffered logits+labels blocks + the (4, C, TILE) accumulator.
    itemsize = outputs.dtype.itemsize

    def _vmem_bytes(tp):
        return 2 * C * tp * itemsize + 2 * tp * 4 + 4 * C * tp * 4

    while tile_p > 128 and _vmem_bytes(tile_p) > 24 * 1024 * 1024:
        tile_p //= 2

    hw_pad = pl.cdiv(hw, tile_p * num_core_splits) * (tile_p * num_core_splits)
    if hw_pad != hw:
        # Rare fallback (only when H*W doesn't tile evenly); padded pixels are
        # masked out in-kernel via the static pixel count `hw`.
        logits = jnp.pad(logits, ((0, 0), (0, 0), (0, hw_pad - hw)))
        lab = jnp.pad(lab, ((0, 0), (0, 0), (0, hw_pad - hw)),
                      constant_values=ignore_index)
    tpc = hw_pad // (tile_p * num_core_splits)        # tiles per core-split per image

    kernel = functools.partial(_criterion_kernel, hw=hw, tile_p=tile_p,
                               needs_mask=(hw_pad != hw), ignore_index=ignore_index)

    stats = pl.pallas_call(
        kernel,
        out_shape=jax.ShapeDtypeStruct((num_core_splits, 4, C), jnp.float32),
        grid_spec=pltpu.PrefetchScalarGridSpec(
            num_scalar_prefetch=0,
            grid=(num_core_splits, B, tpc),
            in_specs=[
                pl.BlockSpec((None, C, tile_p),
                             lambda c, b, t: (b, 0, c * tpc + t)),
                pl.BlockSpec((None, 1, tile_p),
                             lambda c, b, t: (b, 0, c * tpc + t)),
            ],
            out_specs=pl.BlockSpec((1, 4, C), lambda c, b, t: (c, 0, 0)),
            scratch_shapes=[pltpu.VMEM((4, C, tile_p), jnp.float32)],
        ),
        compiler_params=pltpu.CompilerParams(
            dimension_semantics=("parallel", "arbitrary", "arbitrary")),
    )(logits, lab)

    stats = jnp.sum(stats, axis=0)                    # combine per-core partials -> (4, C)
    inter, x_sum, y_sum = stats[0], stats[1], stats[2]
    ce_sum, ce_cnt = stats[3, 0], stats[3, 1]

    smooth = 1e-5
    dice = (2.0 * inter + smooth) / (x_sum + y_sum + smooth)   # per-class dice coeff
    loss_dice = jnp.mean(1.0 - dice)                            # weights all 1
    loss_ce = ce_sum / ce_cnt                                   # mean over valid pixels
    # (matches PyTorch: NaN if every pixel is ignored)

    return cross_entropy_weight * loss_ce + dice_loss_weight * loss_dice


def criterion_ref(outputs, labels, *, num_classes, ignore_index=255,
                  cross_entropy_weight=0.5, dice_loss_weight=0.5):
    """Pure-JAX reference mirroring the PyTorch module."""
    p = jax.nn.softmax(outputs.astype(jnp.float32), axis=1)
    logp = jax.nn.log_softmax(outputs.astype(jnp.float32), axis=1)
    mask = labels != ignore_index
    tgt = jnp.where(mask, labels, 0)
    onehot = jax.nn.one_hot(tgt, num_classes, axis=1, dtype=jnp.float32)

    inter = jnp.sum(p * onehot, axis=(0, 2, 3))
    x_sum = jnp.sum(p * p, axis=(0, 2, 3))
    y_sum = jnp.sum(onehot * onehot, axis=(0, 2, 3))
    smooth = 1e-5
    dice = (2.0 * inter + smooth) / (x_sum + y_sum + smooth)
    loss_dice = jnp.mean(1.0 - dice)

    ce_per = -jnp.take_along_axis(logp, tgt[:, None].astype(jnp.int32), axis=1)[:, 0]
    loss_ce = jnp.sum(ce_per * mask) / jnp.sum(mask)
    return cross_entropy_weight * loss_ce + dice_loss_weight * loss_dice


if __name__ == "__main__":
    key = jax.random.PRNGKey(0)
    IGNORE = 255

    # Case 1: evenly tiling image (no padding path).
    B, C, H, W = 2, 8, 16, 16
    k1, k2, k3 = jax.random.split(key, 3)
    outputs = jax.random.normal(k1, (B, C, H, W), dtype=jnp.float32)
    labels = jax.random.randint(k2, (B, H, W), 0, C, dtype=jnp.int32)
    labels = jnp.where(jax.random.uniform(k3, (B, H, W)) < 0.1, IGNORE, labels)

    loss = jax.block_until_ready(
        criterion_loss(outputs, labels, num_classes=C, ignore_index=IGNORE))
    ref = jax.block_until_ready(
        criterion_ref(outputs, labels, num_classes=C, ignore_index=IGNORE))
    assert jnp.allclose(loss, ref, rtol=5e-3, atol=1e-4), (loss, ref)

    # Case 2: ragged image size (exercises the in-kernel tail mask / padding path).
    B2, H2, W2 = 2, 10, 10
    k4, k5, k6 = jax.random.split(k3, 3)
    outputs2 = jax.random.normal(k4, (B2, C, H2, W2), dtype=jnp.float32)
    labels2 = jax.random.randint(k5, (B2, H2, W2), 0, C, dtype=jnp.int32)
    labels2 = jnp.where(jax.random.uniform(k6, (B2, H2, W2)) < 0.1, IGNORE, labels2)

    loss2 = jax.block_until_ready(
        criterion_loss(outputs2, labels2, num_classes=C, ignore_index=IGNORE))
    ref2 = jax.block_until_ready(
        criterion_ref(outputs2, labels2, num_classes=C, ignore_index=IGNORE))
    assert jnp.allclose(loss2, ref2, rtol=5e-3, atol=1e-4), (loss2, ref2)

    print("KERNEL_OK")
</pallas_src>

<mosaic_0001>
module attributes {stable_mosaic.version = 11 : i64} {
  func.func @_criterion_kernel(%arg0: i32, %arg1: i32, %arg2: i32, %arg3: memref<1x8x128xf32, #tpu.memory_space<vmem>>, %arg4: memref<1x1x128xi32, #tpu.memory_space<vmem>>, %arg5: memref<1x4x8xf32, #tpu.memory_space<vmem>>, %arg6: memref<4x8x128xf32, #tpu.memory_space<vmem>>) attributes {dimension_semantics = [#tpu.dimension_semantics<parallel>, #tpu.dimension_semantics<arbitrary>, #tpu.dimension_semantics<arbitrary>], iteration_bounds = array<i64: 2, 2, 1>, scalar_prefetch = 0 : i64, scratch_operands = 1 : i64, tpu.core_type = #tpu.core_type<tc>, window_params = [{transform_indices = @transform_0, window_bounds = array<i64: 1, 8, 128>}, {transform_indices = @transform_1, window_bounds = array<i64: 1, 1, 128>}, {transform_indices = @transform_2, window_bounds = array<i64: 1, 4, 8>}]} {
    %c0_i32 = arith.constant 0 : i32
    %0 = arith.cmpi eq, %arg1, %c0_i32 : i32
    %c0_i32_0 = arith.constant 0 : i32
    %1 = arith.cmpi eq, %arg2, %c0_i32_0 : i32
    %2 = arith.andi %0, %1 : i1
    %3 = arith.extui %2 : i1 to i32
    %c0_i32_1 = arith.constant 0 : i32
    %4 = arith.cmpi ne, %3, %c0_i32_1 : i32
    scf.if %4 {
      %cst_39 = arith.constant 0.000000e+00 : f32
      %78 = vector.broadcast %cst_39 : f32 to vector<4x8x128xf32>
      %c0_40 = arith.constant 0 : index
      %c0_41 = arith.constant 0 : index
      %c0_42 = arith.constant 0 : index
      %79 = vector.load %arg6[%c0_40, %c0_41, %c0_42] : memref<4x8x128xf32, #tpu.memory_space<vmem>>, vector<4x8x128xf32>
      tpu.vector_store %arg6[%c0_40, %c0_41, %c0_42], %78 {strides = array<i32>} : memref<4x8x128xf32, #tpu.memory_space<vmem>>, vector<4x8x128xf32>,
    } else {
    }
    %c0 = arith.constant 0 : index
    %c0_2 = arith.constant 0 : index
    %c0_3 = arith.constant 0 : index
    %5 = vector.load %arg3[%c0, %c0_2, %c0_3] : memref<1x8x128xf32, #tpu.memory_space<vmem>>, vector<1x8x128xf32>
    %6 = vector.shape_cast %5 : vector<1x8x128xf32> to vector<8x128xf32>
    %c0_4 = arith.constant 0 : index
    %c0_5 = arith.constant 0 : index
    %c0_6 = arith.constant 0 : index
    %7 = vector.load %arg4[%c0_4, %c0_5, %c0_6] : memref<1x1x128xi32, #tpu.memory_space<vmem>>, vector<1x1x128xi32>
    %8 = vector.shape_cast %7 : vector<1x1x128xi32> to vector<1x128xi32>
    %cst = arith.constant dense<0xFF800000> : vector<128xf32>
    %9 = vector.multi_reduction <maximumf>, %6, %cst [0] : vector<8x128xf32> to vector<128xf32>
    %10 = vector.shape_cast %9 : vector<128xf32> to vector<1x128xf32>
    %11 = vector.broadcast %10 : vector<1x128xf32> to vector<8x128xf32>
    %12 = arith.subf %6, %11 : vector<8x128xf32>
    %13 = math.exp %12 : vector<8x128xf32>
    %cst_7 = arith.constant dense<0.000000e+00> : vector<128xf32>
    %14 = vector.multi_reduction <add>, %13, %cst_7 [0] : vector<8x128xf32> to vector<128xf32>
    %15 = vector.shape_cast %14 : vector<128xf32> to vector<1x128xf32>
    %16 = tpu.reciprocal %15 {approx = true} : vector<1x128xf32> -> vector<1x128xf32>
    %17 = vector.broadcast %16 : vector<1x128xf32> to vector<8x128xf32>
    %18 = arith.mulf %13, %17 : vector<8x128xf32>
    %19 = tpu.iota {dimensions = array<i32: 0>} : vector<8x128xi32>
    %c255_i32 = arith.constant 255 : i32
    %20 = vector.broadcast %c255_i32 : i32 to vector<1x128xi32>
    %21 = arith.cmpi ne, %8, %20 : vector<1x128xi32>
    %c0_i32_8 = arith.constant 0 : i32
    %22 = vector.broadcast %c0_i32_8 : i32 to vector<1x128xi32>
    %23 = arith.select %21, %8, %22 : vector<1x128xi1>, vector<1x128xi32>
    %24 = vector.broadcast %23 : vector<1x128xi32> to vector<8x128xi32>
    %25 = arith.cmpi eq, %19, %24 : vector<8x128xi32>
    %26 = arith.extui %25 : vector<8x128xi1> to vector<8x128xi32>
    %27 = arith.sitofp %26 : vector<8x128xi32> to vector<8x128xf32>
    %28 = arith.mulf %18, %18 : vector<8x128xf32>
    %c0_9 = arith.constant 0 : index
    %c0_10 = arith.constant 0 : index
    %c0_11 = arith.constant 0 : index
    %29 = vector.load %arg6[%c0_9, %c0_10, %c0_11] : memref<4x8x128xf32, #tpu.memory_space<vmem>>, vector<1x8x128xf32>
    %30 = vector.shape_cast %29 : vector<1x8x128xf32> to vector<8x128xf32>
    %31 = arith.mulf %18, %27 : vector<8x128xf32>
    %32 = arith.addf %30, %31 : vector<8x128xf32>
    %c0_12 = arith.constant 0 : index
    %c0_13 = arith.constant 0 : index
    %c0_14 = arith.constant 0 : index
    %33 = vector.load %arg6[%c0_12, %c0_13, %c0_14] : memref<4x8x128xf32, #tpu.memory_space<vmem>>, vector<1x8x128xf32>
    %34 = vector.shape_cast %33 : vector<1x8x128xf32> to vector<8x128xf32>
    %35 = vector.shape_cast %32 : vector<8x128xf32> to vector<1x8x128xf32>
    tpu.vector_store %arg6[%c0_12, %c0_13, %c0_14], %35 {strides = array<i32>} : memref<4x8x128xf32, #tpu.memory_space<vmem>>, vector<1x8x128xf32>,
    %c1 = arith.constant 1 : index
    %c0_15 = arith.constant 0 : index
    %c0_16 = arith.constant 0 : index
    %36 = vector.load %arg6[%c1, %c0_15, %c0_16] : memref<4x8x128xf32, #tpu.memory_space<vmem>>, vector<1x8x128xf32>
    %37 = vector.shape_cast %36 : vector<1x8x128xf32> to vector<8x128xf32>
    %38 = arith.addf %37, %28 : vector<8x128xf32>
    %c1_17 = arith.constant 1 : index
    %c0_18 = arith.constant 0 : index
    %c0_19 = arith.constant 0 : index
    %39 = vector.load %arg6[%c1_17, %c0_18, %c0_19] : memref<4x8x128xf32, #tpu.memory_space<vmem>>, vector<1x8x128xf32>
    %40 = vector.shape_cast %39 : vector<1x8x128xf32> to vector<8x128xf32>
    %41 = vector.shape_cast %38 : vector<8x128xf32> to vector<1x8x128xf32>
    tpu.vector_store %arg6[%c1_17, %c0_18, %c0_19], %41 {strides = array<i32>} : memref<4x8x128xf32, #tpu.memory_space<vmem>>, vector<1x8x128xf32>,
    %c2 = arith.constant 2 : index
    %c0_20 = arith.constant 0 : index
    %c0_21 = arith.constant 0 : index
    %42 = vector.load %arg6[%c2, %c0_20, %c0_21] : memref<4x8x128xf32, #tpu.memory_space<vmem>>, vector<1x8x128xf32>
    %43 = vector.shape_cast %42 : vector<1x8x128xf32> to vector<8x128xf32>
    %44 = arith.addf %43, %27 : vector<8x128xf32>
    %c2_22 = arith.constant 2 : index
    %c0_23 = arith.constant 0 : index
    %c0_24 = arith.constant 0 : index
    %45 = vector.load %arg6[%c2_22, %c0_23, %c0_24] : memref<4x8x128xf32, #tpu.memory_space<vmem>>, vector<1x8x128xf32>
    %46 = vector.shape_cast %45 : vector<1x8x128xf32> to vector<8x128xf32>
    %47 = vector.shape_cast %44 : vector<8x128xf32> to vector<1x8x128xf32>
    tpu.vector_store %arg6[%c2_22, %c0_23, %c0_24], %47 {strides = array<i32>} : memref<4x8x128xf32, #tpu.memory_space<vmem>>, vector<1x8x128xf32>,
    %48 = vector.broadcast %8 : vector<1x128xi32> to vector<8x128xi32>
    %49 = arith.cmpi eq, %19, %48 : vector<8x128xi32>
    %50 = arith.extui %49 : vector<8x128xi1> to vector<8x128xi32>
    %51 = arith.sitofp %50 : vector<8x128xi32> to vector<8x128xf32>
    %52 = arith.mulf %6, %51 : vector<8x128xf32>
    %cst_25 = arith.constant dense<0.000000e+00> : vector<128xf32>
    %53 = vector.multi_reduction <add>, %52, %cst_25 [0] : vector<8x128xf32> to vector<128xf32>
    %54 = vector.shape_cast %53 : vector<128xf32> to vector<1x128xf32>
    %55 = arith.subf %10, %54 : vector<1x128xf32>
    %56 = math.log %15 : vector<1x128xf32>
    %57 = arith.addf %55, %56 : vector<1x128xf32>
    %58 = arith.extui %21 : vector<1x128xi1> to vector<1x128xi32>
    %59 = arith.sitofp %58 : vector<1x128xi32> to vector<1x128xf32>
    %c3 = arith.constant 3 : index
    %c0_26 = arith.constant 0 : index
    %c0_27 = arith.constant 0 : index
    %60 = vector.load %arg6[%c3, %c0_26, %c0_27] : memref<4x8x128xf32, #tpu.memory_space<vmem>>, vector<1x1x128xf32>
    %61 = vector.shape_cast %60 : vector<1x1x128xf32> to vector<1x128xf32>
    %62 = arith.mulf %57, %59 : vector<1x128xf32>
    %63 = arith.addf %61, %62 : vector<1x128xf32>
    %c3_28 = arith.constant 3 : index
    %c0_29 = arith.constant 0 : index
    %c0_30 = arith.constant 0 : index
    %64 = vector.load %arg6[%c3_28, %c0_29, %c0_30] : memref<4x8x128xf32, #tpu.memory_space<vmem>>, vector<1x1x128xf32>
    %65 = vector.shape_cast %64 : vector<1x1x128xf32> to vector<1x128xf32>
    %66 = vector.shape_cast %63 : vector<1x128xf32> to vector<1x1x128xf32>
    tpu.vector_store %arg6[%c3_28, %c0_29, %c0_30], %66 {strides = array<i32>} : memref<4x8x128xf32, #tpu.memory_space<vmem>>, vector<1x1x128xf32>,
    %c3_31 = arith.constant 3 : index
    %c1_32 = arith.constant 1 : index
    %c0_33 = arith.constant 0 : index
    %67 = vector.load %arg6[%c3_31, %c1_32, %c0_33] : memref<4x8x128xf32, #tpu.memory_space<vmem>>, vector<1x1x128xf32>
    %68 = vector.shape_cast %67 : vector<1x1x128xf32> to vector<1x128xf32>
    %69 = arith.addf %68, %59 : vector<1x128xf32>
    %c3_34 = arith.constant 3 : index
    %c1_35 = arith.constant 1 : index
    %c0_36 = arith.constant 0 : index
    %70 = vector.load %arg6[%c3_34, %c1_35, %c0_36] : memref<4x8x128xf32, #tpu.memory_space<vmem>>, vector<1x1x128xf32>
    %71 = vector.shape_cast %70 : vector<1x1x128xf32> to vector<1x128xf32>
    %72 = vector.shape_cast %69 : vector<1x128xf32> to vector<1x1x128xf32>
    tpu.vector_store %arg6[%c3_34, %c1_35, %c0_36], %72 {strides = array<i32>} : memref<4x8x128xf32, #tpu.memory_space<vmem>>, vector<1x1x128xf32>,
    %c1_i32 = arith.constant 1 : i32
    %73 = arith.cmpi eq, %arg1, %c1_i32 : i32
    %c0_i32_37 = arith.constant 0 : i32
    %74 = arith.cmpi eq, %arg2, %c0_i32_37 : i32
    %75 = arith.andi %73, %74 : i1
    %76 = arith.extui %75 : i1 to i32
    %c0_i32_38 = arith.constant 0 : i32
    %77 = arith.cmpi ne, %76, %c0_i32_38 : i32
    scf.if %77 {
      %c0_39 = arith.constant 0 : index
      %c0_40 = arith.constant 0 : index
      %c0_41 = arith.constant 0 : index
      %78 = vector.load %arg6[%c0_39, %c0_40, %c0_41] : memref<4x8x128xf32, #tpu.memory_space<vmem>>, vector<4x8x128xf32>
      %cst_42 = arith.constant dense<0.000000e+00> : vector<4x8xf32>
      %79 = vector.multi_reduction <add>, %78, %cst_42 [2] : vector<4x8x128xf32> to vector<4x8xf32>
      %c0_43 = arith.constant 0 : index
      %c0_44 = arith.constant 0 : index
      %c0_45 = arith.constant 0 : index
      %80 = vector.load %arg5[%c0_43, %c0_44, %c0_45] : memref<1x4x8xf32, #tpu.memory_space<vmem>>, vector<1x4x8xf32>
      %81 = vector.shape_cast %80 : vector<1x4x8xf32> to vector<4x8xf32>
      %82 = vector.shape_cast %79 : vector<4x8xf32> to vector<1x4x8xf32>
      tpu.vector_store %arg5[%c0_43, %c0_44, %c0_45], %82 {strides = array<i32>} : memref<1x4x8xf32, #tpu.memory_space<vmem>>, vector<1x4x8xf32>,
    } else {
    }
    return
  }
  func.func @transform_0(%arg0: i32, %arg1: i32, %arg2: i32) -> (i32, i32, i32) {
    %c1_i32 = arith.constant 1 : i32
    %0 = arith.muli %arg0, %c1_i32 : i32
    %1 = arith.addi %0, %arg2 : i32
    %c0_i32 = arith.constant 0 : i32
    %c0_i32_0 = arith.constant 0 : i32
    return %arg1, %c0_i32, %1 : i32, i32, i32
  }
  func.func @transform_1(%arg0: i32, %arg1: i32, %arg2: i32) -> (i32, i32, i32) {
    %c1_i32 = arith.constant 1 : i32
    %0 = arith.muli %arg0, %c1_i32 : i32
    %1 = arith.addi %0, %arg2 : i32
    %c0_i32 = arith.constant 0 : i32
    %c0_i32_0 = arith.constant 0 : i32
    return %arg1, %c0_i32, %1 : i32, i32, i32
  }
  func.func @transform_2(%arg0: i32, %arg1: i32, %arg2: i32) -> (i32, i32, i32) {
    %c0_i32 = arith.constant 0 : i32
    %c0_i32_0 = arith.constant 0 : i32
    %c0_i32_1 = arith.constant 0 : i32
    return %arg0, %c0_i32, %c0_i32_0 : i32, i32, i32
  }
}

</mosaic_0001>

<llo_original>
// kernel: tpu_custom_call.1
$region0: #{tpu_custom_call.1}
  #allocation0 [shape = 'u32[]', space=smem, size = 0x4, offset = 0x4, fixed_abs, tag = 'smem constant byte address 0x4 - core index']
  #allocation1 [shape = 'u32[72,128]{1,0:T(1,128)}', space=vmem, size = 0x9000, scoped, tag = 'internal scratch']
  #allocation2 [shape = 'f32[4,8,128]{2,1,0:T(8,128)}', space=vmem, size = 0x4000, scoped, tag = 'scratch operand']
  %s0 = inlined_call_operand.hbm [shape: f32[2,8,256], index: 0, kind: input, shape index: {}]
  %s1 = inlined_call_operand.hbm [shape: s32[2,1,256], index: 1, kind: input, shape index: {}]
  %s2 = inlined_call_operand.hbm [shape: f32[2,4,8], index: 2, kind: output, shape index: {}]
  %s3 = sld [smem:[#allocation0]]
  $region57: #{tpu_custom_call.1} parent=0
    _
  %s5 = ssub.s32 1, %s3
  %s6 = scalar_select 0, %s5, %s3
  $region1: #{tpu_custom_call.1} parent=0
    #allocation3 [shape = 'u8[8192]{0}', space=vmem, size = 0x2000, scoped, tag = 'input window, operand 0']
    #allocation4 [shape = 's32[2]{0}', space=sflag, size = 0x8, scoped, tag = 'scoped memory for tpu_custom_call.1']
    #allocation5 [shape = 's32[2]{0}', space=sflag, size = 0x8, scoped, tag = 'scoped memory for tpu_custom_call.1']
    #allocation6 [shape = 'u8[1024]{0}', space=vmem, size = 0x400, scoped, tag = 'input window, operand 1']
    #allocation7 [shape = 's32[2]{0}', space=sflag, size = 0x8, scoped, tag = 'scoped memory for tpu_custom_call.1']
    #allocation8 [shape = 'u8[4096]{0}', space=vmem, size = 0x1000, scoped, tag = 'output window, operand 0']
    %7 = vsyncpa [#allocation4], 0
    %s8 = scalar_lea.sflag [#allocation4], 1
    %9 = vsyncpa %s8, 0
    %10 = vsyncpa [#allocation7], 0
    %s11 = scalar_lea.sflag [#allocation7], 1
    %12 = vsyncpa %s11, 0
    %13 = vsyncpa [#allocation5], 0
    %s14 = scalar_lea.sflag [#allocation5], 1
    %15 = vsyncpa %s14, 0
    loop: start=0, step=1, limit=6
    $region2: #{tpu_custom_call.1} parent=1 // loop_pre_header
      _
    $region3: #{tpu_custom_call.1} parent=1 // loop_header
      %s17 = sphi 0, %s21
      %p18 = scmp.ge.s32.totalorder %s17, 6
      %s24 = sphi 0, %s43
      %s25 = sphi 0, %s39
      %s26 = sphi 0, %s35
      %s27 = sphi 0, %s24
      %s28 = sphi 0, %s25
      %s29 = sphi 0, %s26
      %s30 = sphi 0, %s27
      %s31 = sphi 0, %s28
      %s32 = sphi 0, %s29
      %s50 = sphi 0, %s52
      %s53 = sphi 0, %s50
      %s54 = sphi 0, %s53
      %s70 = sphi 0, %s54
      %s80 = sphi 0, %s82
      %s83 = sphi 0, %s80
      %s84 = sphi 0, %s83
      %s100 = sphi 0, %s84
      %s106 = sphi 0, %s108
      %s109 = sphi 0, %s106
      %s110 = sphi 0, %s109
      %s126 = sphi 0, %s110
    $region4: #{tpu_custom_call.1} parent=1 // loop_header_branch
      %20 = sbr.rel (%p18) target = $region8
    $region5: #{tpu_custom_call.1} parent=1 // loop_body
      %s22 = ssub.s32 %s17, 1
      %s23 = ssub.s32 %s17, 2
      %s33 = sadd.s32 1, %s26
      %p34 = scmp.ge.s32.totalorder %s33, 1
      %s35 = scalar_select %p34, 0, %s33
      %s36 = sadd.s32 1, %s25
      %s37 = scalar_select %p34, %s36, %s25
      %p38 = scmp.ge.s32.totalorder %s37, 2
      %s39 = scalar_select %p38, 0, %s37
      %s40 = sadd.s32 1, %s24
      %s41 = scalar_select %p38, %s40, %s24
      %p42 = scmp.ge.s32.totalorder %s41, 2
      %s43 = scalar_select %p42, 0, %s41
      %s44 = sadd.s32 %s24, %s26
      %s45 = sadd.s32 %s43, %s35
      %s46 = ssub.s32 %s25, %s39
      %s47 = ssub.s32 %s44, %s45
      %s48 = sor.u32 %s46, %s47
      %p49 = scmp.eq.s32.totalorder %s48, 0
      %s51 = sadd.s32 %s50, 1
      %s52 = scalar_select %p49, %s50, %s51
      %p55 = pneg %p49
      %p56 = scmp.eq.s32.totalorder %s17, 3
      %p57 = por %p55, %p56
      %p58 = scmp.ne.s32.totalorder %s50, %s53
      %p59 = scmp.eq.s32.totalorder %s17, 0
      %p60 = por %p58, %p59
      %p61 = scmp.ne.s32.totalorder %s50, %s53
      %p62 = scmp.eq.s32.totalorder %s22, 3
      %p63 = por %p61, %p62
      %p64 = scmp.ne.s32.totalorder %s53, %s54
      %p65 = scmp.eq.s32.totalorder %s22, 0
      %p66 = por %p64, %p65
      %p67 = scmp.ne.s32.totalorder %s53, %s54
      %p68 = scmp.eq.s32.totalorder %s23, 3
      %p69 = por %p67, %p68
      %p71 = scmp.ne.s32.totalorder %s54, %s70
      %p72 = scmp.eq.s32.totalorder %s23, 0
      %p73 = por %p71, %p72
      %s74 = sadd.s32 %s24, %s26
      %s75 = sadd.s32 %s43, %s35
      %s76 = ssub.s32 %s25, %s39
      %s77 = ssub.s32 %s74, %s75
      %s78 = sor.u32 %s76, %s77
      %p79 = scmp.eq.s32.totalorder %s78, 0
      %s81 = sadd.s32 %s80, 1
      %s82 = scalar_select %p79, %s80, %s81
      %p85 = pneg %p79
      %p86 = scmp.eq.s32.totalorder %s17, 3
      %p87 = por %p85, %p86
      %p88 = scmp.ne.s32.totalorder %s80, %s83
      %p89 = scmp.eq.s32.totalorder %s17, 0
      %p90 = por %p88, %p89
      %p91 = scmp.ne.s32.totalorder %s80, %s83
      %p92 = scmp.eq.s32.totalorder %s22, 3
      %p93 = por %p91, %p92
      %p94 = scmp.ne.s32.totalorder %s83, %s84
      %p95 = scmp.eq.s32.totalorder %s22, 0
      %p96 = por %p94, %p95
      %p97 = scmp.ne.s32.totalorder %s83, %s84
      %p98 = scmp.eq.s32.totalorder %s23, 3
      %p99 = por %p97, %p98
      %p101 = scmp.ne.s32.totalorder %s84, %s100
      %p102 = scmp.eq.s32.totalorder %s23, 0
      %p103 = por %p101, %p102
      %s104 = ssub.s32 %s24, %s43
      %p105 = scmp.eq.s32.totalorder %s104, 0
      %s107 = sadd.s32 %s106, 1
      %s108 = scalar_select %p105, %s106, %s107
      %p111 = pneg %p105
      %p112 = scmp.eq.s32.totalorder %s17, 3
      %p113 = por %p111, %p112
      %p114 = scmp.ne.s32.totalorder %s106, %s109
      %p115 = scmp.eq.s32.totalorder %s17, 0
      %p116 = por %p114, %p115
      %p117 = scmp.ne.s32.totalorder %s106, %s109
      %p118 = scmp.eq.s32.totalorder %s22, 3
      %p119 = por %p117, %p118
      %p120 = scmp.ne.s32.totalorder %s109, %s110
      %p121 = scmp.eq.s32.totalorder %s22, 0
      %p122 = por %p120, %p121
      %p123 = scmp.ne.s32.totalorder %s109, %s110
      %p124 = scmp.eq.s32.totalorder %s23, 3
      %p125 = por %p123, %p124
      %p127 = scmp.ne.s32.totalorder %s110, %s126
      %p128 = scmp.eq.s32.totalorder %s23, 0
      %p129 = por %p127, %p128
      %p130 = scmp.le.s32.totalorder 1, %s17
      %p131 = scmp.lt.s32.totalorder %s17, 5
      %p132 = pnand %p130, %p131
      %p133 = pneg %p132
      // Predicated region
      $region9: #{tpu_custom_call.1} parent=5 // pred_check
        _
      $region10: #{tpu_custom_call.1} parent=5 // pred_check_branch
        %135 = sbr.rel (%p132) target = $region12
      $region11: #{tpu_custom_call.1} parent=5 // pred_region
        %s136 = ssub.s32 %s17, 1
      $region12: #{tpu_custom_call.1} parent=5 // pred_fallthru
        _
      %p137 = scmp.lt.s32.totalorder %s17, 4
      // Predicated region
      $region13: #{tpu_custom_call.1} parent=5 // pred_check
        %p138 = pneg %p137
      $region14: #{tpu_custom_call.1} parent=5 // pred_check_branch
        %140 = sbr.rel (%p138) target = $region16
      $region15: #{tpu_custom_call.1} parent=5 // pred_region
        // Predicated region
        $region17: #{tpu_custom_call.1} parent=15 // pred_check
          %p141 = pneg %p60
        $region18: #{tpu_custom_call.1} parent=15 // pred_check_branch
          %143 = sbr.rel (%p141) target = $region20
        $region19: #{tpu_custom_call.1} parent=15 // pred_region
          %s144 = sand.u32 %s50, 1
          %s145 = scalar_lea.sflag [#allocation4], %s144
          %s146 = sand.u32 %s50, 1
          %s147 = smul.addr %s146, 8
          %s148 = scalar_lea.vmem [#allocation3], %s147
          %s149 = sadd.s32 %s24, %s26
          %151 = vsyncadd %s145, 0
          %s152 = smul.addr %s25, 2
          %s153 = sadd.s32 %s149, %s152
          %s154 = smul.addr %s153, 8
          %s155 = scalar_lea.hbm %s0, %s154
          %s157 = sshll.u32 %s155, 4
          %s158 = int_to_ptr.hbm [resolvable:$true] %s157
          %s159 = sshll.u32 %s148, 4
          %s160 = int_to_ptr.vmem [resolvable:$true] %s159
          %162 = dma.hbm_to_vmem [thread:$0]  %s158, 128, %s160, %s145
        $region20: #{tpu_custom_call.1} parent=15 // pred_fallthru
          _
        // Predicated region
        $region21: #{tpu_custom_call.1} parent=15 // pred_check
          %p163 = pneg %p90
        $region22: #{tpu_custom_call.1} parent=15 // pred_check_branch
          %165 = sbr.rel (%p163) target = $region24
        $region23: #{tpu_custom_call.1} parent=15 // pred_region
          %s166 = sand.u32 %s80, 1
          %s167 = scalar_lea.sflag [#allocation7], %s166
          %s168 = sand.u32 %s80, 1
          %s169 = scalar_lea.vmem [#allocation6], %s168
          %s170 = sadd.s32 %s24, %s26
          %172 = vsyncadd %s167, 0
          %s173 = smul.addr %s25, 2
          %s174 = sadd.s32 %s170, %s173
          %s175 = scalar_lea.hbm %s1, %s174
          %s177 = sshll.u32 %s175, 4
          %s178 = int_to_ptr.hbm [resolvable:$true] %s177
          %s179 = sshll.u32 %s169, 4
          %s180 = int_to_ptr.vmem [resolvable:$true] %s179
          %182 = dma.hbm_to_vmem [thread:$0]  %s178, 16, %s180, %s167
        $region24: #{tpu_custom_call.1} parent=15 // pred_fallthru
          _
      $region16: #{tpu_custom_call.1} parent=5 // pred_fallthru
        _
      %p183 = scmp.le.s32.totalorder 1, %s17
      %p184 = scmp.lt.s32.totalorder %s17, 5
      %p185 = pnand %p183, %p184
      %p186 = pneg %p185
      // Predicated region
      $region25: #{tpu_custom_call.1} parent=5 // pred_check
        _
      $region26: #{tpu_custom_call.1} parent=5 // pred_check_branch
        %188 = sbr.rel (%p185) target = $region28
      $region27: #{tpu_custom_call.1} parent=5 // pred_region
        %s189 = ssub.s32 %s17, 1
        %s190 = sand.u32 %s53, 1
        %s191 = scalar_lea.sflag [#allocation4], %s190
        %s192 = sand.u32 %s53, 1
        %s193 = smul.addr %s192, 8
        %s194 = scalar_lea.vmem [#allocation3], %s193
        // Predicated region
        $region29: #{tpu_custom_call.1} parent=27 // pred_check
          %p195 = pneg %p66
        $region30: #{tpu_custom_call.1} parent=27 // pred_check_branch
          %197 = sbr.rel (%p195) target = $region32
        $region31: #{tpu_custom_call.1} parent=27 // pred_region
          %199 = dma.done %s191, 128
        $region32: #{tpu_custom_call.1} parent=27 // pred_fallthru
          _
        %s200 = sand.u32 %s83, 1
        %s201 = scalar_lea.sflag [#allocation7], %s200
        %s202 = sand.u32 %s83, 1
        %s203 = scalar_lea.vmem [#allocation6], %s202
        // Predicated region
        $region33: #{tpu_custom_call.1} parent=27 // pred_check
          %p204 = pneg %p96
        $region34: #{tpu_custom_call.1} parent=27 // pred_check_branch
          %206 = sbr.rel (%p204) target = $region36
        $region35: #{tpu_custom_call.1} parent=27 // pred_region
          %208 = dma.done %s201, 16
        $region36: #{tpu_custom_call.1} parent=27 // pred_fallthru
          _
        %s209 = sand.u32 %s53, 1
        %s210 = scalar_lea.sflag [#allocation4], %s209
        %s211 = sand.u32 %s53, 1
        %s212 = smul.addr %s211, 8
        %s213 = scalar_lea.vmem [#allocation3], %s212
        %p214 = pneg %p66
        %p215 = pneg %p63
        %s216 = sand.u32 %s83, 1
        %s217 = scalar_lea.sflag [#allocation7], %s216
        %s218 = sand.u32 %s83, 1
        %s219 = scalar_lea.vmem [#allocation6], %s218
        %p220 = pneg %p96
        %p221 = pneg %p93
        %p222 = pneg %p122
        %p223 = pneg %p119
        %s224 = sand.u32 %s109, 1
        %s225 = scalar_lea.sflag [#allocation5], %s224
        %s226 = sand.u32 %s109, 1
        %s227 = smul.addr %s226, 4
        %s228 = scalar_lea.vmem [#allocation8], %s227
        %s229 = sadd.s32 %s27, %s29
        %s230 = sadd.s32 %s27, %s29
        %p231 = scmp.eq.s32.totalorder %s28, 0
        %p232 = scmp.eq.s32.totalorder %s29, 0
        %p233 = pnand %p231, %p232
        %p234 = pneg %p233
        // Predicated region
        $region37: #{tpu_custom_call.1} parent=27 // pred_check
          _
        $region38: #{tpu_custom_call.1} parent=27 // pred_check_branch
          %236 = sbr.rel (%p233) target = $region40
        $region39: #{tpu_custom_call.1} parent=27 // pred_region
          %237 = vst [vmem:[#allocation2] sm:$0xff] 0.0
          %238 = vst [vmem:[#allocation2 + $0x8] sm:$0xff] 0.0
          %239 = vst [vmem:[#allocation2 + $0x10] sm:$0xff] 0.0
          %240 = vst [vmem:[#allocation2 + $0x18] sm:$0xff] 0.0
        $region40: #{tpu_custom_call.1} parent=27 // pred_fallthru
          _
        %v241 = vld [vmem:[%s194] sm:$0xff]
        %v242 = vld [vmem:[%s203] sm:$0x1]
        %v243 = vrot.slane %v241, 4
        %v244 = vmax.f32 %v241, %v243
        %v245 = vrot.slane %v244, 2
        %v246 = vmax.f32 %v244, %v245
        %v247 = vrot.slane %v246, 1
        %v248 = vmax.f32 %v246, %v247
        %v249 = vsub.f32 %v241, %v248
        %v250 = vmul.f32 %v249, 1.442695
        %v251 = vpow.pop %v250
        %v252 = vrot.slane %v251, 4
        %v253 = vadd.f32 %v251, %v252
        %v254 = vrot.slane %v253, 2
        %v255 = vadd.f32 %v253, %v254
        %v256 = vrot.slane %v255, 1
        %v257 = vadd.f32 %v255, %v256
        %v258 = vrcp.pop %v257
        %v259 = vmul.f32 %v251, %v258
        %v260 = vlaneseq
        %v261 = vshrl.u32 %v260, 7
        %vm262 = vcmp.ne.s32.totalorder %v242, 255
        %v263 = vsel %vm262, %v242, 0
        %v264 = vperm.slane %v263, 0
        %vm265 = vcmp.eq.s32.totalorder %v261, %v264
        %v266 = vsel %vm265, 1, 0
        %v267 = vcvt.s32.f32 %v266
        %v268 = vmul.f32 %v259, %v259
        %v269 = vld [vmem:[#allocation2] sm:$0xff]
        %v270 = vmul.f32 %v259, %v267
        %v271 = vadd.f32 %v269, %v270
        %272 = vst [vmem:[#allocation2] sm:$0xff] %v271
        %s273 = scalar_lea.vmem [#allocation2], 8
        %v274 = vld [vmem:[%s273] sm:$0xff]
        %v275 = vadd.f32 %v274, %v268
        %276 = vst [vmem:[%s273] sm:$0xff] %v275
        %s277 = scalar_lea.vmem [#allocation2], 16
        %v278 = vld [vmem:[%s277] sm:$0xff]
        %v279 = vadd.f32 %v278, %v267
        %280 = vst [vmem:[%s277] sm:$0xff] %v279
        %v281 = vperm.slane %v242, 0
        %vm282 = vcmp.eq.s32.totalorder %v261, %v281
        %v283 = vsel %vm282, 1, 0
        %v284 = vcvt.s32.f32 %v283
        %v285 = vmul.f32 %v241, %v284
        %v286 = vrot.slane %v285, 4
        %v287 = vadd.f32 %v285, %v286
        %v288 = vrot.slane %v287, 2
        %v289 = vadd.f32 %v287, %v288
        %v290 = vrot.slane %v289, 1
        %v291 = vadd.f32 %v289, %v290
        %v292 = vsub.f32 %v248, %v291
        %v293 = vlog2.pop %v257
        %v294 = vmul.f32 %v293, 0.6931472
        %v295 = vadd.f32 %v292, %v294
        %v296 = vsel %vm262, 1, 0
        %v297 = vcvt.s32.f32 %v296
        %s298 = scalar_lea.vmem [#allocation2], 24
        %v299 = vld [vmem:[%s298] sm:$0x1]
        %v300 = vmul.f32 %v295, %v297
        %v301 = vadd.f32 %v299, %v300
        %302 = vst [vmem:[%s298] sm:$0x1] %v301
        %v303 = vld [vmem:[%s298 + $0x1] sm:$0x1]
        %v304 = vadd.f32 %v303, %v297
        %305 = vst [vmem:[%s298 + $0x1] sm:$0x1] %v304
        %p306 = scmp.eq.s32.totalorder %s28, 1
        %p307 = pnand %p306, %p232
        %p308 = pneg %p307
        // Predicated region
        $region41: #{tpu_custom_call.1} parent=27 // pred_check
          _
        $region42: #{tpu_custom_call.1} parent=27 // pred_check_branch
          %310 = sbr.rel (%p307) target = $region44
        $region43: #{tpu_custom_call.1} parent=27 // pred_region
          %v311 = vld [vmem:[#allocation2] sm:$0xff]
          %v312 = vld [vmem:[#allocation2 + $0x8] sm:$0xff]
          %v313 = vld [vmem:[#allocation2 + $0x10] sm:$0xff]
          %v314 = vld [vmem:[#allocation2 + $0x18] sm:$0xff]
          %315 = vadd.xlane.f32.xlu0 %v311
          %v316 = vpop.xlane.xlu0 %315
          %317 = vadd.xlane.f32.xlu0 %v312
          %v318 = vpop.xlane.xlu0 %317
          %319 = vadd.xlane.f32.xlu0 %v313
          %v320 = vpop.xlane.xlu0 %319
          %321 = vadd.xlane.f32.xlu0 %v314
          %v322 = vpop.xlane.xlu0 %321
          %v327 = vlaneseq
          %v328 = vand.u32 %v327, 127
          %v329 = vperm.slane %v316, %v328
          %v330 = vperm.slane %v318, %v328
          %v331 = vperm.slane %v320, %v328
          %v332 = vperm.slane %v322, %v328
          %vm333 = vcmask 1041409
          %v334 = vsel %vm333, %v330, %v329
          %vm335 = vcmask 1042434
          %v336 = vsel %vm335, %v331, %v334
          %vm337 = vcmask 1043459
          %v338 = vsel %vm337, %v332, %v336
          %vm340 = vcmask 60416
          %341 = vst.msk [vmem:[%s228] sm:$0xf] %vm340, %v338
        $region44: #{tpu_custom_call.1} parent=27 // pred_fallthru
          _
        %s342 = sand.u32 %s109, 1
        %s343 = scalar_lea.sflag [#allocation5], %s342
        %s344 = sand.u32 %s109, 1
        %s345 = smul.addr %s344, 4
        %s346 = scalar_lea.vmem [#allocation8], %s345
        // Predicated region
        $region45: #{tpu_custom_call.1} parent=27 // pred_check
          %p347 = pneg %p119
        $region46: #{tpu_custom_call.1} parent=27 // pred_check_branch
          %349 = sbr.rel (%p347) target = $region48
        $region47: #{tpu_custom_call.1} parent=27 // pred_region
          %351 = vsyncadd %s343, 0
          %s352 = smul.addr %s27, 4
          %s353 = scalar_lea.hbm %s2, %s352
          %s355 = sshll.u32 %s346, 4
          %s356 = int_to_ptr.vmem [resolvable:$true] %s355
          %s357 = sshll.u32 %s353, 4
          %s358 = int_to_ptr.hbm [resolvable:$true] %s357
          %360 = dma.vmem_to_hbm [thread:$0]  %s356, 64, %s358, %s343
        $region48: #{tpu_custom_call.1} parent=27 // pred_fallthru
          _
      $region28: #{tpu_custom_call.1} parent=5 // pred_fallthru
        _
      %p361 = scmp.le.s32.totalorder 2, %s17
      // Predicated region
      $region49: #{tpu_custom_call.1} parent=5 // pred_check
        %p362 = pneg %p361
      $region50: #{tpu_custom_call.1} parent=5 // pred_check_branch
        %364 = sbr.rel (%p362) target = $region52
      $region51: #{tpu_custom_call.1} parent=5 // pred_region
        %s365 = ssub.s32 %s17, 2
        // Predicated region
        $region53: #{tpu_custom_call.1} parent=51 // pred_check
          %p366 = pneg %p125
        $region54: #{tpu_custom_call.1} parent=51 // pred_check_branch
          %368 = sbr.rel (%p366) target = $region56
        $region55: #{tpu_custom_call.1} parent=51 // pred_region
          %s369 = sand.u32 %s110, 1
          %s370 = scalar_lea.sflag [#allocation5], %s369
          %s371 = sand.u32 %s110, 1
          %s372 = smul.addr %s371, 4
          %s373 = scalar_lea.vmem [#allocation8], %s372
          %375 = dma.done %s370, 64
        $region56: #{tpu_custom_call.1} parent=51 // pred_fallthru
          _
      $region52: #{tpu_custom_call.1} parent=5 // pred_fallthru
        _
    $region6: #{tpu_custom_call.1} parent=1 // loop_footer
      %s21 = sadd.s32 1, %s17
    $region7: #{tpu_custom_call.1} parent=1 // loop_footer_branch
      %16 = sbr.rel target = $region3
    $region8: #{tpu_custom_call.1} parent=1 // loop_exit
      _
    %376 = vsyncpa [#allocation4], 1
    %s377 = scalar_lea.sflag [#allocation4], 1
    %378 = vsyncpa %s377, 1
    %379 = vsyncpa [#allocation7], 1
    %s380 = scalar_lea.sflag [#allocation7], 1
    %381 = vsyncpa %s380, 1
    %382 = vsyncpa [#allocation5], 1
    %s383 = scalar_lea.sflag [#allocation5], 1
    %384 = vsyncpa %s383, 1

</llo_original>
